<compile_context>
chip_gen: v5e
topology: v5e:2x2
jax: 0.10.0
libtpu: 0.0.40
codegen_flags: <defaults>
</compile_context>

<pallas_src>
import jax
import jax.numpy as jnp
from jax.experimental import pallas as pl
from jax.experimental.pallas import tpu as pltpu

# ~2 MiB per f32 block: with input+output double-buffering that is ~8 MiB of
# VMEM, inside every generation's default scoped-VMEM budget (v5e 16 MiB,
# v6e 32 MiB, v7x 32 of 64 MiB), and large enough to reach ~85% of the HBM
# roofline for a pure streaming elementwise op.
_TARGET_BLOCK_ELEMS = 512 * 1024


def _h_swish_kernel(x_ref, o_ref):
    x = x_ref[...]
    if x.dtype == jnp.float32:
        # Native f32 path: x * clip(x+3, 0, 6) / 6
        o_ref[...] = x * (jnp.clip(x + 3.0, 0.0, 6.0) * (1.0 / 6.0))
    else:
        # Sub-f32 dtypes: compute in f32 (required on v5e; harmless elsewhere).
        # TODO(synk): compute natively in bf16 on v6e/v7x to halve VALU work.
        xf = x.astype(jnp.float32)
        hs = jnp.clip(xf + 3.0, 0.0, 6.0) * (1.0 / 6.0)
        o_ref[...] = (xf * hs).astype(o_ref.dtype)


def _pick_2d_layout(n):
    """Pick a lane-dense 2D (rows, lane) view of a flat length-n array.

    Prefers the widest lane dim (multiple of 128) that divides n, subject to
    the tiling rule: the block's second-to-last dim must be a multiple of 8
    OR the block must cover the full rows extent (single block)."""
    for lane in (2048, 1024, 512, 256, 128):
        if n % lane != 0:
            continue
        rows = n // lane
        if rows % 8 == 0 or rows * lane <= _TARGET_BLOCK_ELEMS:
            return rows, lane
    return None


def _h_swish_2d(x2d):
    rows, lane = x2d.shape
    if rows % 8 == 0 and rows > 8:
        # Multi-MiB row-blocks, (8,128)-aligned.
        block_rows = min(rows, max(8, (_TARGET_BLOCK_ELEMS // lane) // 8 * 8))
    else:
        # Small / non-multiple-of-8 rows: one full-extent block along rows.
        block_rows = rows

    grid = (pl.cdiv(rows, block_rows),)

    return pl.pallas_call(
        _h_swish_kernel,
        out_shape=jax.ShapeDtypeStruct((rows, lane), x2d.dtype),
        grid_spec=pltpu.PrefetchScalarGridSpec(
            num_scalar_prefetch=0,
            grid=grid,
            in_specs=[pl.BlockSpec((block_rows, lane), lambda i: (i, 0))],
            out_specs=pl.BlockSpec((block_rows, lane), lambda i: (i, 0)),
        ),
        compiler_params=pltpu.CompilerParams(
            # Mem-bound elementwise: lets the row-block axis shard across the
            # two TensorCores on v7x; measured neutral on v5e/v6e.
            dimension_semantics=("parallel",),
        ),
    )(x2d)


def h_swish(x):
    """Hard-swish: x * clip(x + 3, 0, 6) / 6. Elementwise, any shape/layout."""
    orig_shape = x.shape
    n = x.size
    flat = jnp.ravel(x)

    layout = _pick_2d_layout(n)
    if layout is not None:
        # Common path (conv/NCHW activation sizes are multiples of 128):
        # no padding copy, no post-slice — only free reshapes around the call.
        rows, lane = layout
        out2d = _h_swish_2d(flat.reshape(rows, lane))
        return out2d.reshape(orig_shape)

    # Rare ragged path: pad once to a multiple of (8*128), slice afterwards.
    tile = 8 * 128
    n_pad = -(-n // tile) * tile
    flat_p = jnp.concatenate([flat, jnp.zeros((n_pad - n,), dtype=x.dtype)])
    rows, lane = _pick_2d_layout(n_pad)
    out2d = _h_swish_2d(flat_p.reshape(rows, lane))
    return out2d.reshape(-1)[:n].reshape(orig_shape)


if __name__ == "__main__":
    key = jax.random.PRNGKey(0)
    x = jax.random.normal(key, (2, 4, 16, 16), dtype=jnp.float32)  # NCHW

    y = jax.block_until_ready(h_swish(x))

    # Reference check (plain JAX).
    ref = x * jnp.clip(x + 3.0, 0.0, 6.0) / 6.0
    assert y.shape == x.shape and y.dtype == x.dtype
    assert jnp.allclose(y, ref, atol=1e-6, rtol=1e-6)

    print("KERNEL_OK")
</pallas_src>

<mosaic_0001>
module attributes {stable_mosaic.version = 11 : i64} {
  func.func @_h_swish_kernel(%arg0: i32, %arg1: memref<1x2048xf32, #tpu.memory_space<vmem>>, %arg2: memref<1x2048xf32, #tpu.memory_space<vmem>>) attributes {dimension_semantics = [#tpu.dimension_semantics<parallel>], iteration_bounds = array<i64: 1>, scalar_prefetch = 0 : i64, scratch_operands = 0 : i64, tpu.core_type = #tpu.core_type<tc>, window_params = [{transform_indices = @transform_0, window_bounds = array<i64: 1, 2048>}, {transform_indices = @transform_1, window_bounds = array<i64: 1, 2048>}]} {
    %c0 = arith.constant 0 : index
    %c0_0 = arith.constant 0 : index
    %0 = vector.load %arg1[%c0, %c0_0] : memref<1x2048xf32, #tpu.memory_space<vmem>>, vector<1x2048xf32>
    %cst = arith.constant 3.000000e+00 : f32
    %1 = vector.broadcast %cst : f32 to vector<1x2048xf32>
    %2 = arith.addf %0, %1 : vector<1x2048xf32>
    %cst_1 = arith.constant 0.000000e+00 : f32
    %cst_2 = arith.constant 6.000000e+00 : f32
    %3 = vector.broadcast %cst_1 : f32 to vector<1x2048xf32>
    %4 = arith.maximumf %3, %2 : vector<1x2048xf32>
    %5 = vector.broadcast %cst_2 : f32 to vector<1x2048xf32>
    %6 = arith.minimumf %5, %4 : vector<1x2048xf32>
    %cst_3 = arith.constant 0.166666672 : f32
    %7 = vector.broadcast %cst_3 : f32 to vector<1x2048xf32>
    %8 = arith.mulf %6, %7 : vector<1x2048xf32>
    %9 = arith.mulf %0, %8 : vector<1x2048xf32>
    %c0_4 = arith.constant 0 : index
    %c0_5 = arith.constant 0 : index
    %10 = vector.load %arg2[%c0_4, %c0_5] : memref<1x2048xf32, #tpu.memory_space<vmem>>, vector<1x2048xf32>
    tpu.vector_store %arg2[%c0_4, %c0_5], %9 {strides = array<i32>} : memref<1x2048xf32, #tpu.memory_space<vmem>>, vector<1x2048xf32>,
    return
  }
  func.func @transform_0(%arg0: i32) -> (i32, i32) {
    %c0_i32 = arith.constant 0 : i32
    %c0_i32_0 = arith.constant 0 : i32
    return %arg0, %c0_i32 : i32, i32
  }
  func.func @transform_1(%arg0: i32) -> (i32, i32) {
    %c0_i32 = arith.constant 0 : i32
    %c0_i32_0 = arith.constant 0 : i32
    return %arg0, %c0_i32 : i32, i32
  }
}

</mosaic_0001>

<llo_original>
// kernel: tpu_custom_call.1
$region0: #{tpu_custom_call.1}
  #allocation0 [shape = 'u32[]', space=smem, size = 0x4, offset = 0x4, fixed_abs, tag = 'smem constant byte address 0x4 - core index']
  #allocation1 [shape = 'u32[72,128]{1,0:T(1,128)}', space=vmem, size = 0x9000, scoped, tag = 'internal scratch']
  %s0 = inlined_call_operand.hbm [shape: f32[1,2048], index: 0, kind: input, shape index: {}]
  %s1 = inlined_call_operand.hbm [shape: f32[1,2048], index: 1, kind: output, shape index: {}]
  %s2 = sld [smem:[#allocation0]]
  $region18: #{tpu_custom_call.1} parent=0
    _
  %s4 = ssub.s32 1, %s2
  %s5 = scalar_select 0, %s4, %s2
  $region1: #{tpu_custom_call.1} parent=0
    #allocation2 [shape = 'u8[8192]{0}', space=vmem, size = 0x2000, scoped, tag = 'input window, operand 0, single buffered']
    #allocation3 [shape = 's32[1]{0}', space=sflag, size = 0x4, scoped, tag = 'scoped memory for tpu_custom_call.1']
    #allocation4 [shape = 's32[1]{0}', space=sflag, size = 0x4, scoped, tag = 'scoped memory for tpu_custom_call.1']
    #allocation5 [shape = 'u8[8192]{0}', space=vmem, size = 0x2000, scoped, tag = 'output window, operand 0, single buffered']
    %6 = vsyncpa [#allocation3], 0
    %7 = vsyncpa [#allocation4], 0
    // Predicated region
    $region2: #{tpu_custom_call.1} parent=1 // pred_check
      _
    $region3: #{tpu_custom_call.1} parent=1 // pred_check_branch
      %9 = sbr.rel (0) target = $region5
    $region4: #{tpu_custom_call.1} parent=1 // pred_region
      %11 = vsyncadd [#allocation3], 0
      %s13 = sshll.u32 %s0, 4
      %s14 = int_to_ptr.hbm [resolvable:$true] %s13
      %s15 = sshll.u32 [#allocation2], 4
      %s16 = int_to_ptr.vmem [resolvable:$true] %s15
      %18 = dma.hbm_to_vmem [thread:$0]  %s14, 256, %s16, [#allocation3]
    $region5: #{tpu_custom_call.1} parent=1 // pred_fallthru
      _
    // Predicated region
    $region6: #{tpu_custom_call.1} parent=1 // pred_check
      _
    $region7: #{tpu_custom_call.1} parent=1 // pred_check_branch
      %20 = sbr.rel (0) target = $region9
    $region8: #{tpu_custom_call.1} parent=1 // pred_region
      %22 = dma.done [#allocation3], 256
    $region9: #{tpu_custom_call.1} parent=1 // pred_fallthru
      _
    %v23 = vld [vmem:[#allocation2] sm:$0xff]
    %v24 = vld [vmem:[#allocation2 + $0x8] sm:$0xff]
    %v25 = vadd.f32 %v23, 3.0
    %v26 = vadd.f32 %v24, 3.0
    %v27 = vmax.f32 %v25, 0.0
    %v28 = vmax.f32 %v26, 0.0
    %v29 = vmin.f32 %v27, 6.0
    %v30 = vmin.f32 %v28, 6.0
    %v31 = vmul.f32 %v29, 0.16666667
    %v32 = vmul.f32 %v30, 0.16666667
    %v33 = vmul.f32 %v23, %v31
    %v34 = vmul.f32 %v24, %v32
    %35 = vst [vmem:[#allocation5] sm:$0xff] %v33
    %36 = vst [vmem:[#allocation5 + $0x8] sm:$0xff] %v34
    // Predicated region
    $region10: #{tpu_custom_call.1} parent=1 // pred_check
      _
    $region11: #{tpu_custom_call.1} parent=1 // pred_check_branch
      %38 = sbr.rel (0) target = $region13
    $region12: #{tpu_custom_call.1} parent=1 // pred_region
      %40 = vsyncadd [#allocation4], 0
      %s42 = sshll.u32 [#allocation5], 4
      %s43 = int_to_ptr.vmem [resolvable:$true] %s42
      %s44 = sshll.u32 %s1, 4
      %s45 = int_to_ptr.hbm [resolvable:$true] %s44
      %47 = dma.vmem_to_hbm [thread:$0]  %s43, 256, %s45, [#allocation4]
    $region13: #{tpu_custom_call.1} parent=1 // pred_fallthru
      _
    // Predicated region
    $region14: #{tpu_custom_call.1} parent=1 // pred_check
      _
    $region15: #{tpu_custom_call.1} parent=1 // pred_check_branch
      %49 = sbr.rel (0) target = $region17
    $region16: #{tpu_custom_call.1} parent=1 // pred_region
      %51 = dma.done [#allocation4], 256
    $region17: #{tpu_custom_call.1} parent=1 // pred_fallthru
      _
    %52 = vsyncpa [#allocation3], 1
    %53 = vsyncpa [#allocation4], 1

</llo_original>
